<compile_context>
chip_gen: v7x
topology: tpu7x:2x2x1
jax: 0.10.0
libtpu: 0.0.40
codegen_flags: <defaults>
</compile_context>

<pallas_src>
import functools

import jax
import jax.numpy as jnp
from jax.experimental import pallas as pl
from jax.experimental.pallas import tpu as pltpu

# Synthetic sizes (nb_movies is data-dependent in the original script).
NB_MOVIES = 200
H1 = 20
H2 = 10
# Batch several users per pallas_call; at 8 rows the kernel is pure fixed
# overhead on every TPU generation (perf-review guidance).
BATCH = 64

LANE = 128       # lane / MXU tile width; feature pad target
MAX_TB = 1024    # upper bound on batch-tile rows (VMEM budget may lower it)


def _round_up(n, m):
    return (n + m - 1) // m * m


def _pad2(a, rows, cols):
    a = jnp.asarray(a)
    assert rows >= a.shape[0] and cols >= a.shape[1]
    return jnp.pad(a, ((0, rows - a.shape[0]), (0, cols - a.shape[1])))


def _min_sublane(dtype):
    # f32 -> 8, bf16 -> 16 (sub-32-bit dtypes pack along sublanes).
    return 8 * (4 // jnp.dtype(dtype).itemsize)


def _vmem_capacity_bytes():
    try:
        cap = getattr(pltpu.get_tpu_info(), "vmem_capacity_bytes", None)
        if cap:
            return int(cap)
    except Exception:
        pass
    return 64 * 1024 * 1024   # conservative fallback: v7x per-TensorCore VMEM


def sae_kernel(x_ref, w1_ref, b1_ref, w2_ref, b2_ref,
               w3_ref, b3_ref, w4_ref, b4_ref, o_ref):
    """Fused 4-layer MLP on one (tb, nmov) batch tile; weights VMEM-resident."""

    def dense(h, w_ref, b_ref):
        # Narrow (bf16) MXU operands, f32 accumulation, f32 bias add.
        z = jnp.dot(h.astype(w_ref.dtype), w_ref[...],
                    preferred_element_type=jnp.float32)
        return z + b_ref[...]

    h = jax.nn.sigmoid(dense(x_ref[...], w1_ref, b1_ref))   # f32 EUP sigmoid (v5e-safe)
    h = jax.nn.sigmoid(dense(h, w2_ref, b2_ref))
    h = jax.nn.sigmoid(dense(h, w3_ref, b3_ref))
    o_ref[...] = dense(h, w4_ref, b4_ref).astype(o_ref.dtype)


def prepare_params(params, weight_dtype=jnp.bfloat16):
    """One-time pad + cast of weights/biases.  Call OUTSIDE the per-step path."""
    nmov, h1 = params["w1"].shape
    h2 = params["w2"].shape[1]
    hp = _round_up(max(h1, h2), LANE)       # hidden dims padded to lane width (robust for any h1/h2)
    np_out = _round_up(nmov, LANE)          # lane-dense output feature dim
    # Zero-padded weight rows/cols keep numerics unchanged: padded hidden lanes
    # give sigmoid(0)=0.5 but hit zero rows of the next weight; padded output
    # columns are zero and sliced/ignored by the caller.
    return {
        # w1 keeps nmov rows so x needs NO feature-dim padding.
        "w1": _pad2(params["w1"], nmov, hp).astype(weight_dtype),
        "b1": _pad2(params["b1"], 1, hp).astype(jnp.float32),
        "w2": _pad2(params["w2"], hp, hp).astype(weight_dtype),
        "b2": _pad2(params["b2"], 1, hp).astype(jnp.float32),
        "w3": _pad2(params["w3"], hp, hp).astype(weight_dtype),
        "b3": _pad2(params["b3"], 1, hp).astype(jnp.float32),
        "w4": _pad2(params["w4"], hp, np_out).astype(weight_dtype),
        "b4": _pad2(params["b4"], 1, np_out).astype(jnp.float32),
    }


def sae_forward(x, pp, out_dtype=None, max_tb=MAX_TB):
    """x: (batch, nb_movies) f32/bf16.  pp: prepare_params() output.

    Returns the PADDED output (bp, np_out); slice [:batch, :nb_movies] (or,
    better, consume the lane-dense layout directly downstream)."""
    batch, nmov = x.shape
    assert pp["w1"].shape[0] == nmov, "x feature dim must match prepared w1"
    hp = pp["w1"].shape[1]
    np_out = pp["w4"].shape[1]
    out_dtype = x.dtype if out_dtype is None else jnp.dtype(out_dtype)

    x_b = jnp.dtype(x.dtype).itemsize
    o_b = jnp.dtype(out_dtype).itemsize
    min_tile = max(_min_sublane(x.dtype), _min_sublane(out_dtype))

    # ---- batch-tile size from a per-generation VMEM budget ------------------
    vmem_cap = _vmem_capacity_bytes()
    weight_bytes = sum(int(pp[k].size) * pp[k].dtype.itemsize
                       for k in ("w1", "w2", "w3", "w4"))
    bias_bytes = sum(int(pp[k].size) * pp[k].dtype.itemsize
                     for k in ("b1", "b2", "b3", "b4"))
    resident_bytes = 2 * (weight_bytes + bias_bytes)   # conservative: x2 buffers
    per_row_bytes = (2 * nmov * x_b       # double-buffered x tile
                     + 2 * np_out * o_b   # double-buffered out tile
                     + np_out * 4         # f32 fc4 accumulator
                     + 4 * hp * 4)        # f32 hidden intermediates
    budget = int(0.7 * vmem_cap) - resident_bytes
    # TODO(synk): if resident weights ever approach ~1/2 of VMEM (extreme
    # nb_movies), tile fc4 over output columns (inner grid axis with hidden
    # activations cached in scratch) and fc1 over K instead of keeping w1+w4
    # fully resident.
    tb_budget = max(min_tile,
                    (max(budget, 0) // per_row_bytes) // min_tile * min_tile)

    bp = _round_up(max(batch, min_tile), min_tile)
    tb = max(min_tile, min(max_tb, tb_budget, bp))
    if bp <= tb and bp >= 2 * min_tile:
        # Force >=2 grid steps so ("parallel",) shards across both v7x TCs.
        tb = _round_up(-(-bp // 2), min_tile)
    bp = _round_up(bp, tb)

    if bp != batch:  # only pad the batch dim, and only when needed
        x = jnp.pad(x, ((0, bp - batch), (0, 0)))

    vmem_need = resident_bytes + tb * per_row_bytes
    vmem_limit = int(min(max(vmem_need + (8 << 20), 32 << 20),
                         int(0.85 * vmem_cap)))

    cost = pl.CostEstimate(   # padded shapes, matching actual work
        flops=2 * bp * (nmov * hp + 2 * hp * hp + hp * np_out),
        transcendentals=3 * bp * hp,
        bytes_accessed=(bp * nmov * x_b + bp * np_out * o_b
                        + weight_bytes + bias_bytes),
    )

    def resident(arr):
        # Whole array VMEM-resident across all grid steps (constant block index).
        return pl.BlockSpec(arr.shape, lambda i: (0, 0))

    out = pl.pallas_call(
        sae_kernel,
        out_shape=jax.ShapeDtypeStruct((bp, np_out), out_dtype),
        grid=(bp // tb,),
        in_specs=[
            # x batch tile: last dim == full array dim (no feature padding).
            pl.BlockSpec((tb, nmov), lambda i: (i, 0)),
            resident(pp["w1"]), resident(pp["b1"]),
            resident(pp["w2"]), resident(pp["b2"]),
            resident(pp["w3"]), resident(pp["b3"]),
            resident(pp["w4"]), resident(pp["b4"]),
        ],
        out_specs=pl.BlockSpec((tb, np_out), lambda i: (i, 0)),  # lane-dense store
        compiler_params=pltpu.CompilerParams(
            dimension_semantics=("parallel",),
            vmem_limit_bytes=vmem_limit,
        ),
        cost_estimate=cost,
    )(x, pp["w1"], pp["b1"], pp["w2"], pp["b2"],
      pp["w3"], pp["b3"], pp["w4"], pp["b4"])
    return out


def init_params(key, nb_movies=NB_MOVIES, h1=H1, h2=H2):
    """Deterministic PyTorch-style Linear init: U(-1/sqrt(in), 1/sqrt(in))."""
    dims = [(nb_movies, h1), (h1, h2), (h2, h1), (h1, nb_movies)]
    params = {}
    keys = jax.random.split(key, 2 * len(dims))
    for i, (din, dout) in enumerate(dims):
        bound = 1.0 / (din ** 0.5)
        params[f"w{i + 1}"] = jax.random.uniform(
            keys[2 * i], (din, dout), jnp.float32, minval=-bound, maxval=bound)
        params[f"b{i + 1}"] = jax.random.uniform(
            keys[2 * i + 1], (1, dout), jnp.float32, minval=-bound, maxval=bound)
    return params


def sae_reference(x, p, weight_dtype=jnp.bfloat16):
    """Plain-JAX reference with the same operand quantization / f32 accumulation."""
    def dense(h, w, b):
        return jnp.dot(h.astype(weight_dtype), w.astype(weight_dtype),
                       preferred_element_type=jnp.float32) + b

    h = jax.nn.sigmoid(dense(x, p["w1"], p["b1"]))
    h = jax.nn.sigmoid(dense(h, p["w2"], p["b2"]))
    h = jax.nn.sigmoid(dense(h, p["w3"], p["b3"]))
    return dense(h, p["w4"], p["b4"])


if __name__ == "__main__":
    key = jax.random.PRNGKey(0)
    pkey, xkey = jax.random.split(key)
    params = init_params(pkey)
    # Ratings-like input in [0, 5); bf16 activation I/O (halves HBM bytes).
    x = (5.0 * jax.random.uniform(xkey, (BATCH, NB_MOVIES), jnp.float32)
         ).astype(jnp.bfloat16)

    padded = prepare_params(params)   # one-time pad + bf16 cast, outside jit

    fwd = jax.jit(functools.partial(sae_forward, out_dtype=jnp.bfloat16))
    out_padded = jax.block_until_ready(fwd(x, padded))

    out = jnp.asarray(out_padded, jnp.float32)[:BATCH, :NB_MOVIES]
    ref = sae_reference(x, params)

    assert out.shape == (BATCH, NB_MOVIES)
    err = float(jnp.max(jnp.abs(out - ref)))
    # Tolerance covers the bf16 output rounding (~half-ulp of |out| <~ 1.5)
    # plus MXU-vs-XLA f32 reduce-order differences.
    assert jnp.allclose(out, ref, atol=2e-2, rtol=2e-2), f"max abs err {err}"

    print("KERNEL_OK")
</pallas_src>

<mosaic_0001>
module attributes {stable_mosaic.version = 11 : i64} {
  func.func @sae_kernel(%arg0: i32, %arg1: memref<32x200xbf16, #tpu.memory_space<vmem>>, %arg2: memref<200x128xbf16, #tpu.memory_space<vmem>>, %arg3: memref<1x128xf32, #tpu.memory_space<vmem>>, %arg4: memref<128x128xbf16, #tpu.memory_space<vmem>>, %arg5: memref<1x128xf32, #tpu.memory_space<vmem>>, %arg6: memref<128x128xbf16, #tpu.memory_space<vmem>>, %arg7: memref<1x128xf32, #tpu.memory_space<vmem>>, %arg8: memref<128x256xbf16, #tpu.memory_space<vmem>>, %arg9: memref<1x256xf32, #tpu.memory_space<vmem>>, %arg10: memref<32x256xbf16, #tpu.memory_space<vmem>>) attributes {dimension_semantics = [#tpu.dimension_semantics<parallel>], iteration_bounds = array<i64: 2>, scalar_prefetch = 0 : i64, scratch_operands = 0 : i64, tpu.core_type = #tpu.core_type<tc>, window_params = [{transform_indices = @transform_0, window_bounds = array<i64: 32, 200>}, {pipeline_mode = #tpu.pipeline_mode<synchronous>, transform_indices = @transform_1, window_bounds = array<i64: 200, 128>}, {pipeline_mode = #tpu.pipeline_mode<synchronous>, transform_indices = @transform_2, window_bounds = array<i64: 1, 128>}, {pipeline_mode = #tpu.pipeline_mode<synchronous>, transform_indices = @transform_3, window_bounds = array<i64: 128, 128>}, {pipeline_mode = #tpu.pipeline_mode<synchronous>, transform_indices = @transform_4, window_bounds = array<i64: 1, 128>}, {pipeline_mode = #tpu.pipeline_mode<synchronous>, transform_indices = @transform_5, window_bounds = array<i64: 128, 128>}, {pipeline_mode = #tpu.pipeline_mode<synchronous>, transform_indices = @transform_6, window_bounds = array<i64: 1, 128>}, {pipeline_mode = #tpu.pipeline_mode<synchronous>, transform_indices = @transform_7, window_bounds = array<i64: 128, 256>}, {pipeline_mode = #tpu.pipeline_mode<synchronous>, transform_indices = @transform_8, window_bounds = array<i64: 1, 256>}, {transform_indices = @transform_9, window_bounds = array<i64: 32, 256>}]} {
    %c0 = arith.constant 0 : index
    %c0_0 = arith.constant 0 : index
    %0 = vector.load %arg1[%c0, %c0_0] : memref<32x200xbf16, #tpu.memory_space<vmem>>, vector<32x200xbf16>
    %c0_1 = arith.constant 0 : index
    %c0_2 = arith.constant 0 : index
    %1 = vector.load %arg2[%c0_1, %c0_2] : memref<200x128xbf16, #tpu.memory_space<vmem>>, vector<200x128xbf16>
    %cst = arith.constant dense<0.000000e+00> : vector<32x128xf32>
    %2 = tpu.matmul %0, %1, %cst {dimension_numbers = #tpu.dot_dimension_numbers<[1], [0], [0], [1], [0, 0, 1, 1], [], []>} : vector<32x200xbf16>, vector<200x128xbf16>, vector<32x128xf32> -> vector<32x128xf32>
    %c0_3 = arith.constant 0 : index
    %c0_4 = arith.constant 0 : index
    %3 = vector.load %arg3[%c0_3, %c0_4] : memref<1x128xf32, #tpu.memory_space<vmem>>, vector<1x128xf32>
    %4 = vector.broadcast %3 : vector<1x128xf32> to vector<32x128xf32>
    %5 = arith.addf %2, %4 : vector<32x128xf32>
    %6 = arith.negf %5 : vector<32x128xf32>
    %7 = math.exp %6 : vector<32x128xf32>
    %cst_5 = arith.constant 1.000000e+00 : f32
    %8 = vector.broadcast %cst_5 : f32 to vector<32x128xf32>
    %9 = arith.addf %8, %7 : vector<32x128xf32>
    %10 = arith.divf %8, %9 : vector<32x128xf32>
    %11 = arith.truncf %10 : vector<32x128xf32> to vector<32x128xbf16>
    %c0_6 = arith.constant 0 : index
    %c0_7 = arith.constant 0 : index
    %12 = vector.load %arg4[%c0_6, %c0_7] : memref<128x128xbf16, #tpu.memory_space<vmem>>, vector<128x128xbf16>
    %cst_8 = arith.constant dense<0.000000e+00> : vector<32x128xf32>
    %13 = tpu.matmul %11, %12, %cst_8 {dimension_numbers = #tpu.dot_dimension_numbers<[1], [0], [0], [1], [0, 0, 1, 1], [], []>} : vector<32x128xbf16>, vector<128x128xbf16>, vector<32x128xf32> -> vector<32x128xf32>
    %c0_9 = arith.constant 0 : index
    %c0_10 = arith.constant 0 : index
    %14 = vector.load %arg5[%c0_9, %c0_10] : memref<1x128xf32, #tpu.memory_space<vmem>>, vector<1x128xf32>
    %15 = vector.broadcast %14 : vector<1x128xf32> to vector<32x128xf32>
    %16 = arith.addf %13, %15 : vector<32x128xf32>
    %17 = arith.negf %16 : vector<32x128xf32>
    %18 = math.exp %17 : vector<32x128xf32>
    %cst_11 = arith.constant 1.000000e+00 : f32
    %19 = vector.broadcast %cst_11 : f32 to vector<32x128xf32>
    %20 = arith.addf %19, %18 : vector<32x128xf32>
    %21 = arith.divf %19, %20 : vector<32x128xf32>
    %22 = arith.truncf %21 : vector<32x128xf32> to vector<32x128xbf16>
    %c0_12 = arith.constant 0 : index
    %c0_13 = arith.constant 0 : index
    %23 = vector.load %arg6[%c0_12, %c0_13] : memref<128x128xbf16, #tpu.memory_space<vmem>>, vector<128x128xbf16>
    %cst_14 = arith.constant dense<0.000000e+00> : vector<32x128xf32>
    %24 = tpu.matmul %22, %23, %cst_14 {dimension_numbers = #tpu.dot_dimension_numbers<[1], [0], [0], [1], [0, 0, 1, 1], [], []>} : vector<32x128xbf16>, vector<128x128xbf16>, vector<32x128xf32> -> vector<32x128xf32>
    %c0_15 = arith.constant 0 : index
    %c0_16 = arith.constant 0 : index
    %25 = vector.load %arg7[%c0_15, %c0_16] : memref<1x128xf32, #tpu.memory_space<vmem>>, vector<1x128xf32>
    %26 = vector.broadcast %25 : vector<1x128xf32> to vector<32x128xf32>
    %27 = arith.addf %24, %26 : vector<32x128xf32>
    %28 = arith.negf %27 : vector<32x128xf32>
    %29 = math.exp %28 : vector<32x128xf32>
    %cst_17 = arith.constant 1.000000e+00 : f32
    %30 = vector.broadcast %cst_17 : f32 to vector<32x128xf32>
    %31 = arith.addf %30, %29 : vector<32x128xf32>
    %32 = arith.divf %30, %31 : vector<32x128xf32>
    %33 = arith.truncf %32 : vector<32x128xf32> to vector<32x128xbf16>
    %c0_18 = arith.constant 0 : index
    %c0_19 = arith.constant 0 : index
    %34 = vector.load %arg8[%c0_18, %c0_19] : memref<128x256xbf16, #tpu.memory_space<vmem>>, vector<128x256xbf16>
    %cst_20 = arith.constant dense<0.000000e+00> : vector<32x256xf32>
    %35 = tpu.matmul %33, %34, %cst_20 {dimension_numbers = #tpu.dot_dimension_numbers<[1], [0], [0], [1], [0, 0, 1, 1], [], []>} : vector<32x128xbf16>, vector<128x256xbf16>, vector<32x256xf32> -> vector<32x256xf32>
    %c0_21 = arith.constant 0 : index
    %c0_22 = arith.constant 0 : index
    %36 = vector.load %arg9[%c0_21, %c0_22] : memref<1x256xf32, #tpu.memory_space<vmem>>, vector<1x256xf32>
    %37 = vector.broadcast %36 : vector<1x256xf32> to vector<32x256xf32>
    %38 = arith.addf %35, %37 : vector<32x256xf32>
    %39 = arith.truncf %38 : vector<32x256xf32> to vector<32x256xbf16>
    %c0_23 = arith.constant 0 : index
    %c0_24 = arith.constant 0 : index
    %40 = vector.load %arg10[%c0_23, %c0_24] : memref<32x256xbf16, #tpu.memory_space<vmem>>, vector<32x256xbf16>
    tpu.vector_store %arg10[%c0_23, %c0_24], %39 {strides = array<i32>} : memref<32x256xbf16, #tpu.memory_space<vmem>>, vector<32x256xbf16>,
    return
  }
  func.func @transform_0(%arg0: i32) -> (i32, i32) {
    %c0_i32 = arith.constant 0 : i32
    %c0_i32_0 = arith.constant 0 : i32
    return %arg0, %c0_i32 : i32, i32
  }
  func.func @transform_1(%arg0: i32) -> (i32, i32) {
    %c0_i32 = arith.constant 0 : i32
    %c0_i32_0 = arith.constant 0 : i32
    %c0_i32_1 = arith.constant 0 : i32
    return %c0_i32, %c0_i32_0 : i32, i32
  }
  func.func @transform_2(%arg0: i32) -> (i32, i32) {
    %c0_i32 = arith.constant 0 : i32
    %c0_i32_0 = arith.constant 0 : i32
    %c0_i32_1 = arith.constant 0 : i32
    return %c0_i32, %c0_i32_0 : i32, i32
  }
  func.func @transform_3(%arg0: i32) -> (i32, i32) {
    %c0_i32 = arith.constant 0 : i32
    %c0_i32_0 = arith.constant 0 : i32
    %c0_i32_1 = arith.constant 0 : i32
    return %c0_i32, %c0_i32_0 : i32, i32
  }
  func.func @transform_4(%arg0: i32) -> (i32, i32) {
    %c0_i32 = arith.constant 0 : i32
    %c0_i32_0 = arith.constant 0 : i32
    %c0_i32_1 = arith.constant 0 : i32
    return %c0_i32, %c0_i32_0 : i32, i32
  }
  func.func @transform_5(%arg0: i32) -> (i32, i32) {
    %c0_i32 = arith.constant 0 : i32
    %c0_i32_0 = arith.constant 0 : i32
    %c0_i32_1 = arith.constant 0 : i32
    return %c0_i32, %c0_i32_0 : i32, i32
  }
  func.func @transform_6(%arg0: i32) -> (i32, i32) {
    %c0_i32 = arith.constant 0 : i32
    %c0_i32_0 = arith.constant 0 : i32
    %c0_i32_1 = arith.constant 0 : i32
    return %c0_i32, %c0_i32_0 : i32, i32
  }
  func.func @transform_7(%arg0: i32) -> (i32, i32) {
    %c0_i32 = arith.constant 0 : i32
    %c0_i32_0 = arith.constant 0 : i32
    %c0_i32_1 = arith.constant 0 : i32
    return %c0_i32, %c0_i32_0 : i32, i32
  }
  func.func @transform_8(%arg0: i32) -> (i32, i32) {
    %c0_i32 = arith.constant 0 : i32
    %c0_i32_0 = arith.constant 0 : i32
    %c0_i32_1 = arith.constant 0 : i32
    return %c0_i32, %c0_i32_0 : i32, i32
  }
  func.func @transform_9(%arg0: i32) -> (i32, i32) {
    %c0_i32 = arith.constant 0 : i32
    %c0_i32_0 = arith.constant 0 : i32
    return %arg0, %c0_i32 : i32, i32
  }
}

</mosaic_0001>

<llo_original>
// kernel: sae_forward.1
$region0: #{sae_forward.1}
  #allocation0 [shape = 'u32[]', space=smem, size = 0x4, offset = 0x4, fixed_abs, tag = 'smem constant byte address 0x4 - core index']
  #allocation1 [shape = 'u32[144,128]{1,0:T(1,128)}', space=vmem, size = 0x12000, scoped, tag = 'internal scratch']
  %s0 = inlined_call_operand.hbm [shape: bf16[64,200], index: 0, kind: input, shape index: {}]
  %s1 = inlined_call_operand.hbm [shape: bf16[200,128], index: 1, kind: input, shape index: {}]
  %s2 = inlined_call_operand.vmem [shape: f32[1,128], index: 2, kind: input, shape index: {}]
  %s3 = inlined_call_operand.hbm [shape: bf16[128,128], index: 3, kind: input, shape index: {}]
  %s4 = inlined_call_operand.vmem [shape: f32[1,128], index: 4, kind: input, shape index: {}]
  %s5 = inlined_call_operand.hbm [shape: bf16[128,128], index: 5, kind: input, shape index: {}]
  %s6 = inlined_call_operand.vmem [shape: f32[1,128], index: 6, kind: input, shape index: {}]
  %s7 = inlined_call_operand.hbm [shape: bf16[128,256], index: 7, kind: input, shape index: {}]
  %s8 = inlined_call_operand.vmem [shape: f32[1,256], index: 8, kind: input, shape index: {}]
  %s9 = inlined_call_operand.hbm [shape: bf16[64,256], index: 9, kind: output, shape index: {}]
  %s10 = sld [smem:[#allocation0]]
  $region89: #{sae_forward.1} parent=0
    _
  %s12 = ssub.s32 1, %s10
  %s13 = scalar_select 0, %s12, %s10
  $region1: #{sae_forward.1} parent=0
    #allocation2 [shape = 'u8[32768]{0}', space=vmem, size = 0x8000, scoped, tag = 'input window, operand 0']
    #allocation3 [shape = 's32[2]{0}', space=sflag, size = 0x8, scoped, tag = 'scoped memory for sae_forward.1']
    #allocation4 [shape = 's32[2]{0}', space=sflag, size = 0x8, scoped, tag = 'scoped memory for sae_forward.1']
    #allocation5 [shape = 'u8[51200]{0}', space=vmem, size = 0xc800, scoped, tag = 'input window, operand 1, single buffered']
    #allocation6 [shape = 's32[1]{0}', space=sflag, size = 0x4, scoped, tag = 'scoped memory for sae_forward.1']
    #allocation7 [shape = 'u8[32768]{0}', space=vmem, size = 0x8000, scoped, tag = 'input window, operand 3, single buffered']
    #allocation8 [shape = 'u8[32768]{0}', space=vmem, size = 0x8000, scoped, tag = 'input window, operand 5, single buffered']
    #allocation9 [shape = 's32[1]{0}', space=sflag, size = 0x4, scoped, tag = 'scoped memory for sae_forward.1']
    #allocation10 [shape = 'u8[65536]{0}', space=vmem, size = 0x10000, scoped, tag = 'input window, operand 7, single buffered']
    #allocation11 [shape = 'u8[32768]{0}', space=vmem, size = 0x8000, scoped, tag = 'output window, operand 0']
    %14 = vsyncpa [#allocation3], 0
    %s15 = scalar_lea.sflag [#allocation3], 1
    %16 = vsyncpa %s15, 0
    %17 = vsyncpa [#allocation6], 0
    %18 = vsyncpa [#allocation9], 0
    %19 = vsyncpa [#allocation4], 0
    %s20 = scalar_lea.sflag [#allocation4], 1
    %21 = vsyncpa %s20, 0
    loop: start=0, step=1, limit=4
    $region2: #{sae_forward.1} parent=1 // loop_pre_header
      _
    $region3: #{sae_forward.1} parent=1 // loop_header
      %s23 = sphi 0, %s27
      %p24 = scmp.ge.s32.totalorder %s23, 4
      %s33 = sphi 0, %s35
      %s36 = sphi 0, %s33
      %s37 = sphi 0, %s36
      %s53 = sphi 0, %s37
      %s57 = sphi 0, %s57
      %s59 = sphi 0, %s57
      %s60 = sphi 0, %s59
      %s74 = sphi 0, %s60
      %s78 = sphi 0, %s78
      %s80 = sphi 0, %s78
      %s81 = sphi 0, %s80
      %s95 = sphi 0, %s81
      %s99 = sphi 0, %s99
      %s101 = sphi 0, %s99
      %s102 = sphi 0, %s101
      %s116 = sphi 0, %s102
      %s120 = sphi 0, %s120
      %s122 = sphi 0, %s120
      %s123 = sphi 0, %s122
      %s137 = sphi 0, %s123
      %s141 = sphi 0, %s141
      %s143 = sphi 0, %s141
      %s144 = sphi 0, %s143
      %s158 = sphi 0, %s144
      %s162 = sphi 0, %s162
      %s164 = sphi 0, %s162
      %s165 = sphi 0, %s164
      %s179 = sphi 0, %s165
      %s183 = sphi 0, %s183
      %s185 = sphi 0, %s183
      %s186 = sphi 0, %s185
      %s200 = sphi 0, %s186
      %s204 = sphi 0, %s204
      %s206 = sphi 0, %s204
      %s207 = sphi 0, %s206
      %s221 = sphi 0, %s207
      %s227 = sphi 0, %s229
      %s230 = sphi 0, %s227
      %s231 = sphi 0, %s230
      %s247 = sphi 0, %s231
    $region4: #{sae_forward.1} parent=1 // loop_header_branch
      %26 = sbr.rel (%p24) target = $region8
    $region5: #{sae_forward.1} parent=1 // loop_body
      %s28 = ssub.s32 %s23, 1
      %s29 = ssub.s32 %s23, 2
      %s30 = sadd.s32 %s23, 1
      %s31 = ssub.s32 %s23, %s30
      %p32 = scmp.eq.s32.totalorder %s31, 0
      %s34 = sadd.s32 %s33, 1
      %s35 = scalar_select %p32, %s33, %s34
      %p38 = pneg %p32
      %p39 = scmp.eq.s32.totalorder %s23, 1
      %p40 = por %p38, %p39
      %p41 = scmp.ne.s32.totalorder %s33, %s36
      %p42 = scmp.eq.s32.totalorder %s23, 0
      %p43 = por %p41, %p42
      %p44 = scmp.ne.s32.totalorder %s33, %s36
      %p45 = scmp.eq.s32.totalorder %s28, 1
      %p46 = por %p44, %p45
      %p47 = scmp.ne.s32.totalorder %s36, %s37
      %p48 = scmp.eq.s32.totalorder %s28, 0
      %p49 = por %p47, %p48
      %p50 = scmp.ne.s32.totalorder %s36, %s37
      %p51 = scmp.eq.s32.totalorder %s29, 1
      %p52 = por %p50, %p51
      %p54 = scmp.ne.s32.totalorder %s37, %s53
      %p55 = scmp.eq.s32.totalorder %s29, 0
      %p56 = por %p54, %p55
      %s58 = sadd.s32 %s57, 1
      %p61 = scmp.eq.s32.totalorder %s23, 1
      %p62 = scmp.ne.s32.totalorder %s57, %s59
      %p63 = scmp.eq.s32.totalorder %s23, 0
      %p64 = por %p62, %p63
      %p65 = scmp.ne.s32.totalorder %s57, %s59
      %p66 = scmp.eq.s32.totalorder %s28, 1
      %p67 = por %p65, %p66
      %p68 = scmp.ne.s32.totalorder %s59, %s60
      %p69 = scmp.eq.s32.totalorder %s28, 0
      %p70 = por %p68, %p69
      %p71 = scmp.ne.s32.totalorder %s59, %s60
      %p72 = scmp.eq.s32.totalorder %s29, 1
      %p73 = por %p71, %p72
      %p75 = scmp.ne.s32.totalorder %s60, %s74
      %p76 = scmp.eq.s32.totalorder %s29, 0
      %p77 = por %p75, %p76
      %s79 = sadd.s32 %s78, 1
      %p82 = scmp.eq.s32.totalorder %s23, 1
      %p83 = scmp.ne.s32.totalorder %s78, %s80
      %p84 = scmp.eq.s32.totalorder %s23, 0
      %p85 = por %p83, %p84
      %p86 = scmp.ne.s32.totalorder %s78, %s80
      %p87 = scmp.eq.s32.totalorder %s28, 1
      %p88 = por %p86, %p87
      %p89 = scmp.ne.s32.totalorder %s80, %s81
      %p90 = scmp.eq.s32.totalorder %s28, 0
      %p91 = por %p89, %p90
      %p92 = scmp.ne.s32.totalorder %s80, %s81
      %p93 = scmp.eq.s32.totalorder %s29, 1
      %p94 = por %p92, %p93
      %p96 = scmp.ne.s32.totalorder %s81, %s95
      %p97 = scmp.eq.s32.totalorder %s29, 0
      %p98 = por %p96, %p97
      %s100 = sadd.s32 %s99, 1
      %p103 = scmp.eq.s32.totalorder %s23, 1
      %p104 = scmp.ne.s32.totalorder %s99, %s101
      %p105 = scmp.eq.s32.totalorder %s23, 0
      %p106 = por %p104, %p105
      %p107 = scmp.ne.s32.totalorder %s99, %s101
      %p108 = scmp.eq.s32.totalorder %s28, 1
      %p109 = por %p107, %p108
      %p110 = scmp.ne.s32.totalorder %s101, %s102
      %p111 = scmp.eq.s32.totalorder %s28, 0
      %p112 = por %p110, %p111
      %p113 = scmp.ne.s32.totalorder %s101, %s102
      %p114 = scmp.eq.s32.totalorder %s29, 1
      %p115 = por %p113, %p114
      %p117 = scmp.ne.s32.totalorder %s102, %s116
      %p118 = scmp.eq.s32.totalorder %s29, 0
      %p119 = por %p117, %p118
      %s121 = sadd.s32 %s120, 1
      %p124 = scmp.eq.s32.totalorder %s23, 1
      %p125 = scmp.ne.s32.totalorder %s120, %s122
      %p126 = scmp.eq.s32.totalorder %s23, 0
      %p127 = por %p125, %p126
      %p128 = scmp.ne.s32.totalorder %s120, %s122
      %p129 = scmp.eq.s32.totalorder %s28, 1
      %p130 = por %p128, %p129
      %p131 = scmp.ne.s32.totalorder %s122, %s123
      %p132 = scmp.eq.s32.totalorder %s28, 0
      %p133 = por %p131, %p132
      %p134 = scmp.ne.s32.totalorder %s122, %s123
      %p135 = scmp.eq.s32.totalorder %s29, 1
      %p136 = por %p134, %p135
      %p138 = scmp.ne.s32.totalorder %s123, %s137
      %p139 = scmp.eq.s32.totalorder %s29, 0
      %p140 = por %p138, %p139
      %s142 = sadd.s32 %s141, 1
      %p145 = scmp.eq.s32.totalorder %s23, 1
      %p146 = scmp.ne.s32.totalorder %s141, %s143
      %p147 = scmp.eq.s32.totalorder %s23, 0
      %p148 = por %p146, %p147
      %p149 = scmp.ne.s32.totalorder %s141, %s143
      %p150 = scmp.eq.s32.totalorder %s28, 1
      %p151 = por %p149, %p150
      %p152 = scmp.ne.s32.totalorder %s143, %s144
      %p153 = scmp.eq.s32.totalorder %s28, 0
      %p154 = por %p152, %p153
      %p155 = scmp.ne.s32.totalorder %s143, %s144
      %p156 = scmp.eq.s32.totalorder %s29, 1
      %p157 = por %p155, %p156
      %p159 = scmp.ne.s32.totalorder %s144, %s158
      %p160 = scmp.eq.s32.totalorder %s29, 0
      %p161 = por %p159, %p160
      %s163 = sadd.s32 %s162, 1
      %p166 = scmp.eq.s32.totalorder %s23, 1
      %p167 = scmp.ne.s32.totalorder %s162, %s164
      %p168 = scmp.eq.s32.totalorder %s23, 0
      %p169 = por %p167, %p168
      %p170 = scmp.ne.s32.totalorder %s162, %s164
      %p171 = scmp.eq.s32.totalorder %s28, 1
      %p172 = por %p170, %p171
      %p173 = scmp.ne.s32.totalorder %s164, %s165
      %p174 = scmp.eq.s32.totalorder %s28, 0
      %p175 = por %p173, %p174
      %p176 = scmp.ne.s32.totalorder %s164, %s165
      %p177 = scmp.eq.s32.totalorder %s29, 1
      %p178 = por %p176, %p177
      %p180 = scmp.ne.s32.totalorder %s165, %s179
      %p181 = scmp.eq.s32.totalorder %s29, 0
      %p182 = por %p180, %p181
      %s184 = sadd.s32 %s183, 1
      %p187 = scmp.eq.s32.totalorder %s23, 1
      %p188 = scmp.ne.s32.totalorder %s183, %s185
      %p189 = scmp.eq.s32.totalorder %s23, 0
      %p190 = por %p188, %p189
      %p191 = scmp.ne.s32.totalorder %s183, %s185
      %p192 = scmp.eq.s32.totalorder %s28, 1
      %p193 = por %p191, %p192
      %p194 = scmp.ne.s32.totalorder %s185, %s186
      %p195 = scmp.eq.s32.totalorder %s28, 0
      %p196 = por %p194, %p195
      %p197 = scmp.ne.s32.totalorder %s185, %s186
      %p198 = scmp.eq.s32.totalorder %s29, 1
      %p199 = por %p197, %p198
      %p201 = scmp.ne.s32.totalorder %s186, %s200
      %p202 = scmp.eq.s32.totalorder %s29, 0
      %p203 = por %p201, %p202
      %s205 = sadd.s32 %s204, 1
      %p208 = scmp.eq.s32.totalorder %s23, 1
      %p209 = scmp.ne.s32.totalorder %s204, %s206
      %p210 = scmp.eq.s32.totalorder %s23, 0
      %p211 = por %p209, %p210
      %p212 = scmp.ne.s32.totalorder %s204, %s206
      %p213 = scmp.eq.s32.totalorder %s28, 1
      %p214 = por %p212, %p213
      %p215 = scmp.ne.s32.totalorder %s206, %s207
      %p216 = scmp.eq.s32.totalorder %s28, 0
      %p217 = por %p215, %p216
      %p218 = scmp.ne.s32.totalorder %s206, %s207
      %p219 = scmp.eq.s32.totalorder %s29, 1
      %p220 = por %p218, %p219
      %p222 = scmp.ne.s32.totalorder %s207, %s221
      %p223 = scmp.eq.s32.totalorder %s29, 0
      %p224 = por %p222, %p223
      %s225 = ssub.s32 %s23, %s30
      %p226 = scmp.eq.s32.totalorder %s225, 0
      %s228 = sadd.s32 %s227, 1
      %s229 = scalar_select %p226, %s227, %s228
      %p232 = pneg %p226
      %p233 = scmp.eq.s32.totalorder %s23, 1
      %p234 = por %p232, %p233
      %p235 = scmp.ne.s32.totalorder %s227, %s230
      %p236 = scmp.eq.s32.totalorder %s23, 0
      %p237 = por %p235, %p236
      %p238 = scmp.ne.s32.totalorder %s227, %s230
      %p239 = scmp.eq.s32.totalorder %s28, 1
      %p240 = por %p238, %p239
      %p241 = scmp.ne.s32.totalorder %s230, %s231
      %p242 = scmp.eq.s32.totalorder %s28, 0
      %p243 = por %p241, %p242
      %p244 = scmp.ne.s32.totalorder %s230, %s231
      %p245 = scmp.eq.s32.totalorder %s29, 1
      %p246 = por %p244, %p245
      %p248 = scmp.ne.s32.totalorder %s231, %s247
      %p249 = scmp.eq.s32.totalorder %s29, 0
      %p250 = por %p248, %p249
      %p251 = scmp.le.s32.totalorder 1, %s23
      %p252 = scmp.lt.s32.totalorder %s23, 3
      %p253 = pnand %p251, %p252
      %p254 = pneg %p253
      // Predicated region
      $region9: #{sae_forward.1} parent=5 // pred_check
        _
      $region10: #{sae_forward.1} parent=5 // pred_check_branch
        %256 = sbr.rel (%p253) target = $region12
      $region11: #{sae_forward.1} parent=5 // pred_region
        %s257 = ssub.s32 %s23, 1
        // Predicated region
        $region13: #{sae_forward.1} parent=11 // pred_check
          %p258 = pneg %p70
        $region14: #{sae_forward.1} parent=11 // pred_check_branch
          %260 = sbr.rel (%p258) target = $region16
        $region15: #{sae_forward.1} parent=11 // pred_region
          %s262 = ssub.s32 1600, 1600
          %263 = vsyncadd [#allocation6], %s262
          %s264 = sshll.u32 [#allocation5], 4
          %s265 = int_to_ptr.vmem [resolvable:$true] %s264
          %270 = dma.hbm_to_vmem [thread:$0]  %s1, 1600, %s265, [#allocation6], 64, 64, 4
        $region16: #{sae_forward.1} parent=11 // pred_fallthru
          _
        // Predicated region
        $region17: #{sae_forward.1} parent=11 // pred_check
          %p271 = pneg %p91
        $region18: #{sae_forward.1} parent=11 // pred_check_branch
          %273 = sbr.rel (%p271) target = $region20
        $region19: #{sae_forward.1} parent=11 // pred_region
          _
        $region20: #{sae_forward.1} parent=11 // pred_fallthru
          _
        // Predicated region
        $region21: #{sae_forward.1} parent=11 // pred_check
          %p274 = pneg %p112
        $region22: #{sae_forward.1} parent=11 // pred_check_branch
          %276 = sbr.rel (%p274) target = $region24
        $region23: #{sae_forward.1} parent=11 // pred_region
          %s278 = ssub.s32 1024, 1024
          %279 = vsyncadd [#allocation6], %s278
          %s280 = sshll.u32 [#allocation7], 4
          %s281 = int_to_ptr.vmem [resolvable:$true] %s280
          %286 = dma.hbm_to_vmem [thread:$0]  %s3, 1024, %s281, [#allocation6], 64, 64, 4
        $region24: #{sae_forward.1} parent=11 // pred_fallthru
          _
        // Predicated region
        $region25: #{sae_forward.1} parent=11 // pred_check
          %p287 = pneg %p133
        $region26: #{sae_forward.1} parent=11 // pred_check_branch
          %289 = sbr.rel (%p287) target = $region28
        $region27: #{sae_forward.1} parent=11 // pred_region
          _
        $region28: #{sae_forward.1} parent=11 // pred_fallthru
          _
        // Predicated region
        $region29: #{sae_forward.1} parent=11 // pred_check
          %p290 = pneg %p154
        $region30: #{sae_forward.1} parent=11 // pred_check_branch
          %292 = sbr.rel (%p290) target = $region32
        $region31: #{sae_forward.1} parent=11 // pred_region
          %s294 = ssub.s32 1024, 1024
          %295 = vsyncadd [#allocation9], %s294
          %s296 = sshll.u32 [#allocation8], 4
          %s297 = int_to_ptr.vmem [resolvable:$true] %s296
          %302 = dma.hbm_to_vmem [thread:$0]  %s5, 1024, %s297, [#allocation9], 64, 64, 4
        $region32: #{sae_forward.1} parent=11 // pred_fallthru
          _
        // Predicated region
        $region33: #{sae_forward.1} parent=11 // pred_check
          %p303 = pneg %p175
        $region34: #{sae_forward.1} parent=11 // pred_check_branch
          %305 = sbr.rel (%p303) target = $region36
        $region35: #{sae_forward.1} parent=11 // pred_region
          _
        $region36: #{sae_forward.1} parent=11 // pred_fallthru
          _
        // Predicated region
        $region37: #{sae_forward.1} parent=11 // pred_check
          %p306 = pneg %p196
        $region38: #{sae_forward.1} parent=11 // pred_check_branch
          %308 = sbr.rel (%p306) target = $region40
        $region39: #{sae_forward.1} parent=11 // pred_region
          %s310 = ssub.s32 2048, 2048
          %311 = vsyncadd [#allocation9], %s310
          %s312 = sshll.u32 [#allocation10], 4
          %s313 = int_to_ptr.vmem [resolvable:$true] %s312
          %318 = dma.hbm_to_vmem [thread:$0]  %s7, 2048, %s313, [#allocation9], 128, 128, 8
        $region40: #{sae_forward.1} parent=11 // pred_fallthru
          _
        // Predicated region
        $region41: #{sae_forward.1} parent=11 // pred_check
          %p319 = pneg %p217
        $region42: #{sae_forward.1} parent=11 // pred_check_branch
          %321 = sbr.rel (%p319) target = $region44
        $region43: #{sae_forward.1} parent=11 // pred_region
          _
        $region44: #{sae_forward.1} parent=11 // pred_fallthru
          _
      $region12: #{sae_forward.1} parent=5 // pred_fallthru
        _
      %p322 = scmp.lt.s32.totalorder %s23, 2
      // Predicated region
      $region45: #{sae_forward.1} parent=5 // pred_check
        %p323 = pneg %p322
      $region46: #{sae_forward.1} parent=5 // pred_check_branch
        %325 = sbr.rel (%p323) target = $region48
      $region47: #{sae_forward.1} parent=5 // pred_region
        // Predicated region
        $region49: #{sae_forward.1} parent=47 // pred_check
          %p326 = pneg %p43
        $region50: #{sae_forward.1} parent=47 // pred_check_branch
          %328 = sbr.rel (%p326) target = $region52
        $region51: #{sae_forward.1} parent=47 // pred_region
          %s329 = sand.u32 %s33, 1
          %s330 = scalar_lea.sflag [#allocation3], %s329
          %s331 = sand.u32 %s33, 1
          %s332 = smul.addr %s331, 32
          %s333 = scalar_lea.vmem [#allocation2], %s332
          %s334 = smul.u32 4, %s23
          %s336 = ssub.s32 512, 512
          %337 = vsyncadd %s330, %s336
          %s338 = smul.addr %s334, 2
          %s339 = smul.addr %s338, 64
          %s340 = scalar_lea.hbm %s0, %s339
          %s341 = sshll.u32 %s333, 4
          %s342 = int_to_ptr.vmem [resolvable:$true] %s341
          %347 = dma.hbm_to_vmem [thread:$0]  %s340, 512, %s342, %s330, 128, 128, 8
        $region52: #{sae_forward.1} parent=47 // pred_fallthru
          _
      $region48: #{sae_forward.1} parent=5 // pred_fallthru
        _
      %p348 = scmp.le.s32.totalorder 1, %s23
      %p349 = scmp.lt.s32.totalorder %s23, 3
      %p350 = pnand %p348, %p349
      %p351 = pneg %p350
      // Predicated region
      $region53: #{sae_forward.1} parent=5 // pred_check
        _
      $region54: #{sae_forward.1} parent=5 // pred_check_branch
        %353 = sbr.rel (%p350) target = $region56
      $region55: #{sae_forward.1} parent=5 // pred_region
        %s354 = ssub.s32 %s23, 1
        %s355 = sand.u32 %s36, 1
        %s356 = scalar_lea.sflag [#allocation3], %s355
        %s357 = sand.u32 %s36, 1
        %s358 = smul.addr %s357, 32
        %s359 = scalar_lea.vmem [#allocation2], %s358
        // Predicated region
        $region57: #{sae_forward.1} parent=55 // pred_check
          %p360 = pneg %p49
        $region58: #{sae_forward.1} parent=55 // pred_check_branch
          %362 = sbr.rel (%p360) target = $region60
        $region59: #{sae_forward.1} parent=55 // pred_region
          %363 = dma.done %s356, 512
        $region60: #{sae_forward.1} parent=55 // pred_fallthru
          _
        // Predicated region
        $region61: #{sae_forward.1} parent=55 // pred_check
          %p364 = pneg %p70
        $region62: #{sae_forward.1} parent=55 // pred_check_branch
          %366 = sbr.rel (%p364) target = $region64
        $region63: #{sae_forward.1} parent=55 // pred_region
          %367 = dma.done [#allocation6], 1600
        $region64: #{sae_forward.1} parent=55 // pred_fallthru
          _
        // Predicated region
        $region65: #{sae_forward.1} parent=55 // pred_check
          %p368 = pneg %p112
        $region66: #{sae_forward.1} parent=55 // pred_check_branch
          %370 = sbr.rel (%p368) target = $region68
        $region67: #{sae_forward.1} parent=55 // pred_region
          %371 = dma.done [#allocation6], 1024
        $region68: #{sae_forward.1} parent=55 // pred_fallthru
          _
        // Predicated region
        $region69: #{sae_forward.1} parent=55 // pred_check
          %p372 = pneg %p154
        $region70: #{sae_forward.1} parent=55 // pred_check_branch
          %374 = sbr.rel (%p372) target = $region72
        $region71: #{sae_forward.1} parent=55 // pred_region
          %375 = dma.done [#allocation9], 1024
        $region72: #{sae_forward.1} parent=55 // pred_fallthru
          _
        // Predicated region
        $region73: #{sae_forward.1} parent=55 // pred_check
          %p376 = pneg %p196
        $region74: #{sae_forward.1} parent=55 // pred_check_branch
          %378 = sbr.rel (%p376) target = $region76
        $region75: #{sae_forward.1} parent=55 // pred_region
          %379 = dma.done [#allocation9], 2048
        $region76: #{sae_forward.1} parent=55 // pred_fallthru
          _
        %s380 = sand.u32 %s36, 1
        %s381 = scalar_lea.sflag [#allocation3], %s380
        %s382 = sand.u32 %s36, 1
        %s383 = smul.addr %s382, 32
        %s384 = scalar_lea.vmem [#allocation2], %s383
        %p385 = pneg %p49
        %p386 = pneg %p46
        %p387 = pneg %p70
        %p388 = pneg %p67
        %p389 = pneg %p91
        %p390 = pneg %p88
        %p391 = pneg %p112
        %p392 = pneg %p109
        %p393 = pneg %p133
        %p394 = pneg %p130
        %p395 = pneg %p154
        %p396 = pneg %p151
        %p397 = pneg %p175
        %p398 = pneg %p172
        %p399 = pneg %p196
        %p400 = pneg %p193
        %p401 = pneg %p217
        %p402 = pneg %p214
        %p403 = pneg %p243
        %p404 = pneg %p240
        %s405 = sand.u32 %s230, 1
        %s406 = scalar_lea.sflag [#allocation4], %s405
        %s407 = sand.u32 %s230, 1
        %s408 = smul.addr %s407, 32
        %s409 = scalar_lea.vmem [#allocation11], %s408
        %s410 = smul.u32 4, %s28
        %s411 = smul.u32 4, %s28
        %v413 = vld [vmem:[%s359] sm:$0xff]
        %v414 = vld [vmem:[%s359 + $0x8] sm:$0xff]
        %v415 = vld [vmem:[%s359 + $0x10] sm:$0xff]
        %v416 = vld [vmem:[%s359 + $0x18] sm:$0xff]
        %v417 = vld [vmem:[#allocation5] sm:$0xf]
        %v418 = vld [vmem:[#allocation5 + $0x4] sm:$0xf]
        %v419 = vld [vmem:[#allocation5 + $0x8] sm:$0xf]
        %v420 = vld [vmem:[#allocation5 + $0xc] sm:$0xf]
        %v421 = vld [vmem:[#allocation5 + $0x10] sm:$0xf]
        %v422 = vld [vmem:[#allocation5 + $0x14] sm:$0xf]
        %v423 = vld [vmem:[#allocation5 + $0x18] sm:$0xf]
        %v424 = vld [vmem:[#allocation5 + $0x1c] sm:$0xf]
        %v425 = vld [vmem:[#allocation5 + $0x20] sm:$0xf]
        %v426 = vld [vmem:[#allocation5 + $0x24] sm:$0xf]
        %v427 = vld [vmem:[#allocation5 + $0x28] sm:$0xf]
        %v428 = vld [vmem:[#allocation5 + $0x2c] sm:$0xf]
        %v429 = vld [vmem:[#allocation5 + $0x30] sm:$0xf]
        %v430 = vld [vmem:[#allocation5 + $0x34] sm:$0xf]
        %v431 = vld [vmem:[#allocation5 + $0x38] sm:$0xf]
        %v432 = vld [vmem:[#allocation5 + $0x3c] sm:$0xf]
        %v433 = vld [vmem:[#allocation5 + $0x40] sm:$0xf]
        %v434 = vld [vmem:[#allocation5 + $0x44] sm:$0xf]
        %v435 = vld [vmem:[#allocation5 + $0x48] sm:$0xf]
        %v436 = vld [vmem:[#allocation5 + $0x4c] sm:$0xf]
        %v437 = vld [vmem:[#allocation5 + $0x50] sm:$0xf]
        %v438 = vld [vmem:[#allocation5 + $0x54] sm:$0xf]
        %v439 = vld [vmem:[#allocation5 + $0x58] sm:$0xf]
        %v440 = vld [vmem:[#allocation5 + $0x5c] sm:$0xf]
        %v441 = vld [vmem:[#allocation5 + $0x60] sm:$0xf]
        %v442 = vld [vmem:[%s2] sm:$0x1]
        %v444 = vlaneseq
        %v445 = vshrl.u32 %v444, 7
        %v446 = vsub.s32 0, %v445
        %v447 = vrot.slane %v442, %v446
        %v453 = vunpack.c.l.b16 %v413
        %v454 = vunpack.c.h.b16 %v413
        %v455 = vunpack.c.l.b16 %v414
        %v456 = vunpack.c.h.b16 %v414
        %v457 = vunpack.c.l.b16 %v415
        %v458 = vunpack.c.h.b16 %v415
        %v459 = vunpack.c.l.b16 %v416
        %v460 = vunpack.c.h.b16 %v416
        %v461 = vpack.c.b16 %v455, %v453
        %v462 = vpack.c.b16 %v456, %v454
        %v463 = vpack.c.b16 %v459, %v457
        %v464 = vpack.c.b16 %v460, %v458
        %v492 = vunpack.c.l.b16 %v417
        %v493 = vunpack.c.l.b16 %v418
        %v494 = vunpack.c.l.b16 %v419
        %v495 = vunpack.c.l.b16 %v420
        %v496 = vunpack.c.l.b16 %v421
        %v497 = vunpack.c.l.b16 %v422
        %v498 = vunpack.c.l.b16 %v423
        %v499 = vunpack.c.l.b16 %v424
        %v500 = vunpack.c.l.b16 %v425
        %v501 = vunpack.c.l.b16 %v426
        %v502 = vunpack.c.l.b16 %v427
        %v503 = vunpack.c.l.b16 %v428
        %v504 = vunpack.c.l.b16 %v429
        %v505 = vunpack.c.l.b16 %v430
        %v506 = vunpack.c.l.b16 %v431
        %v507 = vunpack.c.l.b16 %v432
        %v508 = vunpack.c.l.b16 %v433
        %v509 = vunpack.c.l.b16 %v434
        %v510 = vunpack.c.l.b16 %v435
        %v511 = vunpack.c.l.b16 %v436
        %v512 = vunpack.c.l.b16 %v437
        %v513 = vunpack.c.l.b16 %v438
        %v514 = vunpack.c.l.b16 %v439
        %v515 = vunpack.c.l.b16 %v440
        %v516 = vunpack.c.l.b16 %v441
        %v517 = vpack.c.b16 %v493, %v492
        %v518 = vpack.c.b16 %v495, %v494
        %v519 = vpack.c.b16 %v497, %v496
        %v520 = vpack.c.b16 %v499, %v498
        %v521 = vpack.c.b16 %v501, %v500
        %v522 = vpack.c.b16 %v503, %v502
        %v523 = vpack.c.b16 %v505, %v504
        %v524 = vpack.c.b16 %v507, %v506
        %v525 = vpack.c.b16 %v509, %v508
        %v526 = vpack.c.b16 %v511, %v510
        %v527 = vpack.c.b16 %v513, %v512
        %v528 = vpack.c.b16 %v515, %v514
        %v529 = vpack.c.b16 %v516, %v516
        %vm542 = vcmask 588800
        %v544 = vsel %vm542, %v462, 0
        %v547 = vsel %vm542, %v464, 0
        %vm549 = vcmask 1043456
        %v551 = vsel %vm549, %v529, 0
        %553 = vmatprep.subr.bf16.mxu0 0
        %554 = vmatpush1.bf16.msra.mxu0 %v517
        %555 = vmatprep.subr.bf16.mxu0 0
        %556 = vmatpush1.bf16.msra.mxu0 %v518
        %557 = vmatprep.subr.bf16.mxu0 0
        %558 = vmatpush1.bf16.msra.mxu0 %v519
        %559 = vmatprep.subr.bf16.mxu0 0
        %560 = vmatpush1.bf16.msra.mxu0 %v520
        %561 = vmatprep.subr.bf16.mxu0 0
        %562 = vmatpush1.bf16.msra.mxu0 %v521
        %563 = vmatprep.subr.bf16.mxu0 0
        %564 = vmatpush1.bf16.msra.mxu0 %v522
        %565 = vmatprep.subr.bf16.mxu0 0
        %566 = vmatpush1.bf16.msra.mxu0 %v523
        %567 = vmatprep.subr.bf16.mxu0 0
        %568 = vmatpush1.bf16.msra.mxu0 %v524
        %569 = vmatprep.subr.bf16.mxu0 0
        %570 = vmatpush1.bf16.msra.mxu0 %v525
        %571 = vmatprep.subr.bf16.mxu0 0
        %572 = vmatpush1.bf16.msra.mxu0 %v526
        %573 = vmatprep.subr.bf16.mxu0 0
        %574 = vmatpush1.bf16.msra.mxu0 %v527
        %575 = vmatprep.subr.bf16.mxu0 0
        %576 = vmatpush1.bf16.msra.mxu0 %v528
        %577 = vmatprep.subr.bf16.mxu0 0
        %578 = vmatpush1.bf16.msra.mxu0 %v551
        %579 = vmatprep.subr.bf16.mxu0 0
        %580 = vmatpush1.bf16.msra.mxu0 0
        %581 = vmatprep.subr.bf16.mxu0 0
        %582 = vmatpush1.bf16.msra.mxu0 0
        %583 = vmatprep.subr.bf16.mxu0 0
        %584 = vmatpush1.bf16.msra.mxu0 0
        %585 = vmatprep.mubr.bf16.mxu0 %v544
        %586 = vmatmul.mubr.bf16.gmra.mrb[0].mxu0 %v461
        %v587 = vpop.f32.mrb[0].mxu0
        %v588 = vadd.f32 %v447, %v587
        %v589 = vpop.f32.mrb[0].mxu0
        %v590 = vpop.f32.mrb[0].mxu0
        %v591 = vadd.f32 %v447, %v590
        %v592 = vpop.f32.mrb[0].mxu0
        %593 = vmatprep.mubr.bf16.mxu0 %v547
        %594 = vmatmul.mubr.bf16.gmra.mrb[0].mxu0 %v463
        %v595 = vpop.f32.mrb[0].mxu0
        %v596 = vadd.f32 %v447, %v595
        %v597 = vpop.f32.mrb[0].mxu0
        %v598 = vpop.f32.mrb[0].mxu0
        %v599 = vadd.f32 %v447, %v598
        %v600 = vpop.f32.mrb[0].mxu0
        %601 = vdwg.mxu0
        %v602 = vxor.u32 %v588, 2147483648
        %v603 = vxor.u32 %v591, 2147483648
        %v604 = vxor.u32 %v596, 2147483648
        %v605 = vxor.u32 %v599, 2147483648
        %v606 = vmul.f32 %v602, 1.442695
        %v607 = vpow.pop %v606
        %v608 = vmul.f32 %v603, 1.442695
        %v609 = vpow.pop %v608
        %v610 = vmul.f32 %v604, 1.442695
        %v611 = vpow.pop %v610
        %v612 = vmul.f32 %v605, 1.442695
        %v613 = vpow.pop %v612
        %v614 = vadd.f32 %v607, 1.0
        %v615 = vadd.f32 %v609, 1.0
        %v616 = vadd.f32 %v611, 1.0
        %v617 = vadd.f32 %v613, 1.0
        %v618 = vrcp.pop %v614
        %v619 = vmul.f32 1.0, %v618
        %v620 = vrcp.pop %v615
        %v621 = vmul.f32 1.0, %v620
        %v622 = vrcp.pop %v616
        %v623 = vmul.f32 1.0, %v622
        %v624 = vrcp.pop %v617
        %v625 = vmul.f32 1.0, %v624
        %v626 = vpack.c.bf16 %v621, %v619
        %v627 = vpack.c.bf16 %v625, %v623
        %v628 = vld [vmem:[#allocation7] sm:$0xf]
        %v629 = vld [vmem:[#allocation7 + $0x4] sm:$0xf]
        %v630 = vld [vmem:[#allocation7 + $0x8] sm:$0xf]
        %v631 = vld [vmem:[#allocation7 + $0xc] sm:$0xf]
        %v632 = vld [vmem:[#allocation7 + $0x10] sm:$0xf]
        %v633 = vld [vmem:[#allocation7 + $0x14] sm:$0xf]
        %v634 = vld [vmem:[#allocation7 + $0x18] sm:$0xf]
        %v635 = vld [vmem:[#allocation7 + $0x1c] sm:$0xf]
        %v636 = vld [vmem:[#allocation7 + $0x20] sm:$0xf]
        %v637 = vld [vmem:[#allocation7 + $0x24] sm:$0xf]
        %v638 = vld [vmem:[#allocation7 + $0x28] sm:$0xf]
        %v639 = vld [vmem:[#allocation7 + $0x2c] sm:$0xf]
        %v640 = vld [vmem:[#allocation7 + $0x30] sm:$0xf]
        %v641 = vld [vmem:[#allocation7 + $0x34] sm:$0xf]
        %v642 = vld [vmem:[#allocation7 + $0x38] sm:$0xf]
        %v643 = vld [vmem:[#allocation7 + $0x3c] sm:$0xf]
        %v644 = vld [vmem:[%s4] sm:$0x1]
        %v646 = vlaneseq
        %v647 = vshrl.u32 %v646, 7
        %v648 = vsub.s32 0, %v647
        %v649 = vrot.slane %v644, %v648
        %v667 = vunpack.c.l.b16 %v628
        %v668 = vunpack.c.l.b16 %v629
        %v669 = vunpack.c.l.b16 %v630
        %v670 = vunpack.c.l.b16 %v631
        %v671 = vunpack.c.l.b16 %v632
        %v672 = vunpack.c.l.b16 %v633
        %v673 = vunpack.c.l.b16 %v634
        %v674 = vunpack.c.l.b16 %v635
        %v675 = vunpack.c.l.b16 %v636
        %v676 = vunpack.c.l.b16 %v637
        %v677 = vunpack.c.l.b16 %v638
        %v678 = vunpack.c.l.b16 %v639
        %v679 = vunpack.c.l.b16 %v640
        %v680 = vunpack.c.l.b16 %v641
        %v681 = vunpack.c.l.b16 %v642
        %v682 = vunpack.c.l.b16 %v643
        %v683 = vpack.c.b16 %v668, %v667
        %v684 = vpack.c.b16 %v670, %v669
        %v685 = vpack.c.b16 %v672, %v671
        %v686 = vpack.c.b16 %v674, %v673
        %v687 = vpack.c.b16 %v676, %v675
        %v688 = vpack.c.b16 %v678, %v677
        %v689 = vpack.c.b16 %v680, %v679
        %v690 = vpack.c.b16 %v682, %v681
        %699 = vmatprep.subr.bf16.mxu0 0
        %700 = vmatpush1.bf16.msra.mxu0 %v683
        %701 = vmatprep.subr.bf16.mxu0 0
        %702 = vmatpush1.bf16.msra.mxu0 %v684
        %703 = vmatprep.subr.bf16.mxu0 0
        %704 = vmatpush1.bf16.msra.mxu0 %v685
        %705 = vmatprep.subr.bf16.mxu0 0
        %706 = vmatpush1.bf16.msra.mxu0 %v686
        %707 = vmatprep.subr.bf16.mxu0 0
        %708 = vmatpush1.bf16.msra.mxu0 %v687
        %709 = vmatprep.subr.bf16.mxu0 0
        %710 = vmatpush1.bf16.msra.mxu0 %v688
        %711 = vmatprep.subr.bf16.mxu0 0
        %712 = vmatpush1.bf16.msra.mxu0 %v689
        %713 = vmatprep.subr.bf16.mxu0 0
        %714 = vmatpush1.bf16.msra.mxu0 %v690
        %715 = vmatprep.subr.bf16.mxu0 0
        %716 = vmatpush1.bf16.msra.mxu0 0
        %717 = vmatprep.subr.bf16.mxu0 0
        %718 = vmatpush1.bf16.msra.mxu0 0
        %719 = vmatprep.subr.bf16.mxu0 0
        %720 = vmatpush1.bf16.msra.mxu0 0
        %721 = vmatprep.subr.bf16.mxu0 0
        %722 = vmatpush1.bf16.msra.mxu0 0
        %723 = vmatprep.subr.bf16.mxu0 0
        %724 = vmatpush1.bf16.msra.mxu0 0
        %725 = vmatprep.subr.bf16.mxu0 0
        %726 = vmatpush1.bf16.msra.mxu0 0
        %727 = vmatprep.subr.bf16.mxu0 0
        %728 = vmatpush1.bf16.msra.mxu0 0
        %729 = vmatprep.subr.bf16.mxu0 0
        %730 = vmatpush1.bf16.msra.mxu0 0
        %731 = vmatprep.mubr.bf16.mxu0 0
        %732 = vmatmul.mubr.bf16.gmra.mrb[0].mxu0 %v626
        %v733 = vpop.f32.mrb[0].mxu0
        %v734 = vadd.f32 %v649, %v733
        %v735 = vpop.f32.mrb[0].mxu0
        %v736 = vpop.f32.mrb[0].mxu0
        %v737 = vadd.f32 %v649, %v736
        %v738 = vpop.f32.mrb[0].mxu0
        %739 = vmatprep.mubr.bf16.mxu0 0
        %740 = vmatmul.mubr.bf16.gmra.mrb[0].mxu0 %v627
        %v741 = vpop.f32.mrb[0].mxu0
        %v742 = vadd.f32 %v649, %v741
        %v743 = vpop.f32.mrb[0].mxu0
        %v744 = vpop.f32.mrb[0].mxu0
        %v745 = vadd.f32 %v649, %v744
        %v746 = vpop.f32.mrb[0].mxu0
        %747 = vdwg.mxu0
        %v748 = vxor.u32 %v734, 2147483648
        %v749 = vxor.u32 %v737, 2147483648
        %v750 = vxor.u32 %v742, 2147483648
        %v751 = vxor.u32 %v745, 2147483648
        %v752 = vmul.f32 %v748, 1.442695
        %v753 = vpow.pop %v752
        %v754 = vmul.f32 %v749, 1.442695
        %v755 = vpow.pop %v754
        %v756 = vmul.f32 %v750, 1.442695
        %v757 = vpow.pop %v756
        %v758 = vmul.f32 %v751, 1.442695
        %v759 = vpow.pop %v758
        %v760 = vadd.f32 %v753, 1.0
        %v761 = vadd.f32 %v755, 1.0
        %v762 = vadd.f32 %v757, 1.0
        %v763 = vadd.f32 %v759, 1.0
        %v764 = vrcp.pop %v760
        %v765 = vmul.f32 1.0, %v764
        %v766 = vrcp.pop %v761
        %v767 = vmul.f32 1.0, %v766
        %v768 = vrcp.pop %v762
        %v769 = vmul.f32 1.0, %v768
        %v770 = vrcp.pop %v763
        %v771 = vmul.f32 1.0, %v770
        %v772 = vpack.c.bf16 %v767, %v765
        %v773 = vpack.c.bf16 %v771, %v769
        %v774 = vld [vmem:[#allocation8] sm:$0xf]
        %v775 = vld [vmem:[#allocation8 + $0x4] sm:$0xf]
        %v776 = vld [vmem:[#allocation8 + $0x8] sm:$0xf]
        %v777 = vld [vmem:[#allocation8 + $0xc] sm:$0xf]
        %v778 = vld [vmem:[#allocation8 + $0x10] sm:$0xf]
        %v779 = vld [vmem:[#allocation8 + $0x14] sm:$0xf]
        %v780 = vld [vmem:[#allocation8 + $0x18] sm:$0xf]
        %v781 = vld [vmem:[#allocation8 + $0x1c] sm:$0xf]
        %v782 = vld [vmem:[#allocation8 + $0x20] sm:$0xf]
        %v783 = vld [vmem:[#allocation8 + $0x24] sm:$0xf]
        %v784 = vld [vmem:[#allocation8 + $0x28] sm:$0xf]
        %v785 = vld [vmem:[#allocation8 + $0x2c] sm:$0xf]
        %v786 = vld [vmem:[#allocation8 + $0x30] sm:$0xf]
        %v787 = vld [vmem:[#allocation8 + $0x34] sm:$0xf]
        %v788 = vld [vmem:[#allocation8 + $0x38] sm:$0xf]
        %v789 = vld [vmem:[#allocation8 + $0x3c] sm:$0xf]
        %v790 = vld [vmem:[%s6] sm:$0x1]
        %v792 = vlaneseq
        %v793 = vshrl.u32 %v792, 7
        %v794 = vsub.s32 0, %v793
        %v795 = vrot.slane %v790, %v794
        %v813 = vunpack.c.l.b16 %v774
        %v814 = vunpack.c.l.b16 %v775
        %v815 = vunpack.c.l.b16 %v776
        %v816 = vunpack.c.l.b16 %v777
        %v817 = vunpack.c.l.b16 %v778
        %v818 = vunpack.c.l.b16 %v779
        %v819 = vunpack.c.l.b16 %v780
        %v820 = vunpack.c.l.b16 %v781
        %v821 = vunpack.c.l.b16 %v782
        %v822 = vunpack.c.l.b16 %v783
        %v823 = vunpack.c.l.b16 %v784
        %v824 = vunpack.c.l.b16 %v785
        %v825 = vunpack.c.l.b16 %v786
        %v826 = vunpack.c.l.b16 %v787
        %v827 = vunpack.c.l.b16 %v788
        %v828 = vunpack.c.l.b16 %v789
        %v829 = vpack.c.b16 %v814, %v813
        %v830 = vpack.c.b16 %v816, %v815
        %v831 = vpack.c.b16 %v818, %v817
        %v832 = vpack.c.b16 %v820, %v819
        %v833 = vpack.c.b16 %v822, %v821
        %v834 = vpack.c.b16 %v824, %v823
        %v835 = vpack.c.b16 %v826, %v825
        %v836 = vpack.c.b16 %v828, %v827
        %845 = vmatprep.subr.bf16.mxu0 0
        %846 = vmatpush1.bf16.msra.mxu0 %v829
        %847 = vmatprep.subr.bf16.mxu0 0
        %848 = vmatpush1.bf16.msra.mxu0 %v830
        %849 = vmatprep.subr.bf16.mxu0 0
        %850 = vmatpush1.bf16.msra.mxu0 %v831
        %851 = vmatprep.subr.bf16.mxu0 0
        %852 = vmatpush1.bf16.msra.mxu0 %v832
        %853 = vmatprep.subr.bf16.mxu0 0
        %854 = vmatpush1.bf16.msra.mxu0 %v833
        %855 = vmatprep.subr.bf16.mxu0 0
        %856 = vmatpush1.bf16.msra.mxu0 %v834
        %857 = vmatprep.subr.bf16.mxu0 0
        %858 = vmatpush1.bf16.msra.mxu0 %v835
        %859 = vmatprep.subr.bf16.mxu0 0
        %860 = vmatpush1.bf16.msra.mxu0 %v836
        %861 = vmatprep.subr.bf16.mxu0 0
        %862 = vmatpush1.bf16.msra.mxu0 0
        %863 = vmatprep.subr.bf16.mxu0 0
        %864 = vmatpush1.bf16.msra.mxu0 0
        %865 = vmatprep.subr.bf16.mxu0 0
        %866 = vmatpush1.bf16.msra.mxu0 0
        %867 = vmatprep.subr.bf16.mxu0 0
        %868 = vmatpush1.bf16.msra.mxu0 0
        %869 = vmatprep.subr.bf16.mxu0 0
        %870 = vmatpush1.bf16.msra.mxu0 0
        %871 = vmatprep.subr.bf16.mxu0 0
        %872 = vmatpush1.bf16.msra.mxu0 0
        %873 = vmatprep.subr.bf16.mxu0 0
        %874 = vmatpush1.bf16.msra.mxu0 0
        %875 = vmatprep.subr.bf16.mxu0 0
        %876 = vmatpush1.bf16.msra.mxu0 0
        %877 = vmatprep.mubr.bf16.mxu0 0
        %878 = vmatmul.mubr.bf16.gmra.mrb[0].mxu0 %v772
        %v879 = vpop.f32.mrb[0].mxu0
        %v880 = vadd.f32 %v795, %v879
        %v881 = vpop.f32.mrb[0].mxu0
        %v882 = vpop.f32.mrb[0].mxu0
        %v883 = vadd.f32 %v795, %v882
        %v884 = vpop.f32.mrb[0].mxu0
        %885 = vmatprep.mubr.bf16.mxu0 0
        %886 = vmatmul.mubr.bf16.gmra.mrb[0].mxu0 %v773
        %v887 = vpop.f32.mrb[0].mxu0
        %v888 = vadd.f32 %v795, %v887
        %v889 = vpop.f32.mrb[0].mxu0
        %v890 = vpop.f32.mrb[0].mxu0
        %v891 = vadd.f32 %v795, %v890
        %v892 = vpop.f32.mrb[0].mxu0
        %893 = vdwg.mxu0
        %v894 = vxor.u32 %v880, 2147483648
        %v895 = vxor.u32 %v883, 2147483648
        %v896 = vxor.u32 %v888, 2147483648
        %v897 = vxor.u32 %v891, 2147483648
        %v898 = vmul.f32 %v894, 1.442695
        %v899 = vpow.pop %v898
        %v900 = vmul.f32 %v895, 1.442695
        %v901 = vpow.pop %v900
        %v902 = vmul.f32 %v896, 1.442695
        %v903 = vpow.pop %v902
        %v904 = vmul.f32 %v897, 1.442695
        %v905 = vpow.pop %v904
        %v906 = vadd.f32 %v899, 1.0
        %v907 = vadd.f32 %v901, 1.0
        %v908 = vadd.f32 %v903, 1.0
        %v909 = vadd.f32 %v905, 1.0
        %v910 = vrcp.pop %v906
        %v911 = vmul.f32 1.0, %v910
        %v912 = vrcp.pop %v907
        %v913 = vmul.f32 1.0, %v912
        %v914 = vrcp.pop %v908
        %v915 = vmul.f32 1.0, %v914
        %v916 = vrcp.pop %v909
        %v917 = vmul.f32 1.0, %v916
        %v918 = vpack.c.bf16 %v913, %v911
        %v919 = vpack.c.bf16 %v917, %v915
        %v920 = vld [vmem:[#allocation10] sm:$0xff]
        %v921 = vld [vmem:[#allocation10 + $0x8] sm:$0xff]
        %v922 = vld [vmem:[#allocation10 + $0x10] sm:$0xff]
        %v923 = vld [vmem:[#allocation10 + $0x18] sm:$0xff]
        %v924 = vld [vmem:[#allocation10 + $0x20] sm:$0xff]
        %v925 = vld [vmem:[#allocation10 + $0x28] sm:$0xff]
        %v926 = vld [vmem:[#allocation10 + $0x30] sm:$0xff]
        %v927 = vld [vmem:[#allocation10 + $0x38] sm:$0xff]
        %v928 = vld [vmem:[#allocation10 + $0x40] sm:$0xff]
        %v929 = vld [vmem:[#allocation10 + $0x48] sm:$0xff]
        %v930 = vld [vmem:[#allocation10 + $0x50] sm:$0xff]
        %v931 = vld [vmem:[#allocation10 + $0x58] sm:$0xff]
        %v932 = vld [vmem:[#allocation10 + $0x60] sm:$0xff]
        %v933 = vld [vmem:[#allocation10 + $0x68] sm:$0xff]
        %v934 = vld [vmem:[#allocation10 + $0x70] sm:$0xff]
        %v935 = vld [vmem:[#allocation10 + $0x78] sm:$0xff]
        %v936 = vld [vmem:[%s8] sm:$0x3]
        %v938 = vlaneseq
        %v939 = vshrl.u32 %v938, 7
        %v940 = vsub.s32 0, %v939
        %v941 = vrot.slane %v936, %v940
        %v942 = vlaneseq
        %v943 = vshrl.u32 %v942, 7
        %v944 = vsub.s32 1, %v943
        %v945 = vrot.slane %v936, %v944
        %v964 = vunpack.c.l.b16 %v920
        %v965 = vunpack.c.h.b16 %v920
        %v966 = vunpack.c.l.b16 %v921
        %v967 = vunpack.c.h.b16 %v921
        %v968 = vunpack.c.l.b16 %v922
        %v969 = vunpack.c.h.b16 %v922
        %v970 = vunpack.c.l.b16 %v923
        %v971 = vunpack.c.h.b16 %v923
        %v972 = vunpack.c.l.b16 %v924
        %v973 = vunpack.c.h.b16 %v924
        %v974 = vunpack.c.l.b16 %v925
        %v975 = vunpack.c.h.b16 %v925
        %v976 = vunpack.c.l.b16 %v926
        %v977 = vunpack.c.h.b16 %v926
        %v978 = vunpack.c.l.b16 %v927
        %v979 = vunpack.c.h.b16 %v927
        %v980 = vunpack.c.l.b16 %v928
        %v981 = vunpack.c.h.b16 %v928
        %v982 = vunpack.c.l.b16 %v929
        %v983 = vunpack.c.h.b16 %v929
        %v984 = vunpack.c.l.b16 %v930
        %v985 = vunpack.c.h.b16 %v930
        %v986 = vunpack.c.l.b16 %v931
        %v987 = vunpack.c.h.b16 %v931
        %v988 = vunpack.c.l.b16 %v932
        %v989 = vunpack.c.h.b16 %v932
        %v990 = vunpack.c.l.b16 %v933
        %v991 = vunpack.c.h.b16 %v933
        %v992 = vunpack.c.l.b16 %v934
        %v993 = vunpack.c.h.b16 %v934
        %v994 = vunpack.c.l.b16 %v935
        %v995 = vunpack.c.h.b16 %v935
        %v996 = vpack.c.b16 %v966, %v964
        %v997 = vpack.c.b16 %v967, %v965
        %v998 = vpack.c.b16 %v970, %v968
        %v999 = vpack.c.b16 %v971, %v969
        %v1000 = vpack.c.b16 %v974, %v972
        %v1001 = vpack.c.b16 %v975, %v973
        %v1002 = vpack.c.b16 %v978, %v976
        %v1003 = vpack.c.b16 %v979, %v977
        %v1004 = vpack.c.b16 %v982, %v980
        %v1005 = vpack.c.b16 %v983, %v981
        %v1006 = vpack.c.b16 %v986, %v984
        %v1007 = vpack.c.b16 %v987, %v985
        %v1008 = vpack.c.b16 %v990, %v988
        %v1009 = vpack.c.b16 %v991, %v989
        %v1010 = vpack.c.b16 %v994, %v992
        %v1011 = vpack.c.b16 %v995, %v993
        %1028 = vmatprep.subr.bf16.mxu0 %v997
        %1029 = vmatpush1.bf16.msra.mxu0 %v996
        %1030 = vmatprep.subr.bf16.mxu0 %v999
        %1031 = vmatpush1.bf16.msra.mxu0 %v998
        %1032 = vmatprep.subr.bf16.mxu0 %v1001
        %1033 = vmatpush1.bf16.msra.mxu0 %v1000
        %1034 = vmatprep.subr.bf16.mxu0 %v1003
        %1035 = vmatpush1.bf16.msra.mxu0 %v1002
        %1036 = vmatprep.subr.bf16.mxu0 %v1005
        %1037 = vmatpush1.bf16.msra.mxu0 %v1004
        %1038 = vmatprep.subr.bf16.mxu0 %v1007
        %1039 = vmatpush1.bf16.msra.mxu0 %v1006
        %1040 = vmatprep.subr.bf16.mxu0 %v1009
        %1041 = vmatpush1.bf16.msra.mxu0 %v1008
        %1042 = vmatprep.subr.bf16.mxu0 %v1011
        %1043 = vmatpush1.bf16.msra.mxu0 %v1010
        %1044 = vmatprep.subr.bf16.mxu0 0
        %1045 = vmatpush1.bf16.msra.mxu0 0
        %1046 = vmatprep.subr.bf16.mxu0 0
        %1047 = vmatpush1.bf16.msra.mxu0 0
        %1048 = vmatprep.subr.bf16.mxu0 0
        %1049 = vmatpush1.bf16.msra.mxu0 0
        %1050 = vmatprep.subr.bf16.mxu0 0
        %1051 = vmatpush1.bf16.msra.mxu0 0
        %1052 = vmatprep.subr.bf16.mxu0 0
        %1053 = vmatpush1.bf16.msra.mxu0 0
        %1054 = vmatprep.subr.bf16.mxu0 0
        %1055 = vmatpush1.bf16.msra.mxu0 0
        %1056 = vmatprep.subr.bf16.mxu0 0
        %1057 = vmatpush1.bf16.msra.mxu0 0
        %1058 = vmatprep.subr.bf16.mxu0 0
        %1059 = vmatpush1.bf16.msra.mxu0 0
        %1060 = vmatprep.mubr.bf16.mxu0 0
        %1061 = vmatmul.mubr.bf16.gmra.mrb[0].mxu0 %v918
        %v1062 = vpop.f32.mrb[0].mxu0
        %v1063 = vadd.f32 %v941, %v1062
        %v1064 = vpop.f32.mrb[0].mxu0
        %v1065 = vadd.f32 %v945, %v1064
        %v1066 = vpop.f32.mrb[0].mxu0
        %v1067 = vadd.f32 %v941, %v1066
        %v1068 = vpop.f32.mrb[0].mxu0
        %v1069 = vadd.f32 %v945, %v1068
        %1070 = vmatprep.mubr.bf16.mxu0 0
        %1071 = vmatmul.mubr.bf16.gmra.mrb[0].mxu0 %v919
        %v1072 = vpop.f32.mrb[0].mxu0
        %v1073 = vadd.f32 %v941, %v1072
        %v1074 = vpop.f32.mrb[0].mxu0
        %v1075 = vadd.f32 %v945, %v1074
        %v1076 = vpop.f32.mrb[0].mxu0
        %v1077 = vadd.f32 %v941, %v1076
        %v1078 = vpop.f32.mrb[0].mxu0
        %v1079 = vadd.f32 %v945, %v1078
        %1080 = vdwg.mxu0
        %v1081 = vpack.c.bf16 %v1067, %v1063
        %v1082 = vpack.c.bf16 %v1069, %v1065
        %v1083 = vpack.c.bf16 %v1077, %v1073
        %v1084 = vpack.c.bf16 %v1079, %v1075
        %v1089 = vunpack.c.l.b16 %v1081
        %v1090 = vunpack.c.l.b16 %v1082
        %v1091 = vunpack.c.h.b16 %v1081
        %v1092 = vunpack.c.h.b16 %v1082
        %v1093 = vunpack.c.l.b16 %v1083
        %v1094 = vunpack.c.l.b16 %v1084
        %v1095 = vunpack.c.h.b16 %v1083
        %v1096 = vunpack.c.h.b16 %v1084
        %v1097 = vpack.c.b16 %v1090, %v1089
        %v1098 = vpack.c.b16 %v1092, %v1091
        %v1099 = vpack.c.b16 %v1094, %v1093
        %v1100 = vpack.c.b16 %v1096, %v1095
        %1105 = vst [vmem:[%s409] sm:$0xff] %v1097
        %1106 = vst [vmem:[%s409 + $0x8] sm:$0xff] %v1098
        %1107 = vst [vmem:[%s409 + $0x10] sm:$0xff] %v1099
        %1108 = vst [vmem:[%s409 + $0x18] sm:$0xff] %v1100
        %s1109 = sand.u32 %s230, 1
        %s1110 = scalar_lea.sflag [#allocation4], %s1109
        %s1111 = sand.u32 %s230, 1
        %s1112 = smul.addr %s1111, 32
        %s1113 = scalar_lea.vmem [#allocation11], %s1112
        // Predicated region
        $region77: #{sae_forward.1} parent=55 // pred_check
          %p1114 = pneg %p240
        $region78: #{sae_forward.1} parent=55 // pred_check_branch
          %1116 = sbr.rel (%p1114) target = $region80
        $region79: #{sae_forward.1} parent=55 // pred_region
          %s1117 = smul.u32 4, %s28
          %s1119 = ssub.s32 512, 512
          %1120 = vsyncadd %s1110, %s1119
          %s1121 = smul.addr %s1117, 2
          %s1122 = smul.addr %s1121, 64
          %s1123 = scalar_lea.hbm %s9, %s1122
          %s1124 = sshll.u32 %s1113, 4
          %s1125 = int_to_ptr.vmem [resolvable:$true] %s1124
          %1130 = dma.vmem_to_hbm [thread:$0]  %s1125, 512, %s1123, %s1110, 128, 128, 8
        $region80: #{sae_forward.1} parent=55 // pred_fallthru
          _
      $region56: #{sae_forward.1} parent=5 // pred_fallthru
        _
      %p1131 = scmp.le.s32.totalorder 2, %s23
      // Predicated region
      $region81: #{sae_forward.1} parent=5 // pred_check
        %p1132 = pneg %p1131
      $region82: #{sae_forward.1} parent=5 // pred_check_branch
        %1134 = sbr.rel (%p1132) target = $region84
      $region83: #{sae_forward.1} parent=5 // pred_region
        %s1135 = ssub.s32 %s23, 2
        // Predicated region
        $region85: #{sae_forward.1} parent=83 // pred_check
          %p1136 = pneg %p246
        $region86: #{sae_forward.1} parent=83 // pred_check_branch
          %1138 = sbr.rel (%p1136) target = $region88
        $region87: #{sae_forward.1} parent=83 // pred_region
          %s1139 = sand.u32 %s231, 1
          %s1140 = scalar_lea.sflag [#allocation4], %s1139
          %s1141 = sand.u32 %s231, 1
          %s1142 = smul.addr %s1141, 32
          %s1143 = scalar_lea.vmem [#allocation11], %s1142
          %1144 = dma.done %s1140, 512
        $region88: #{sae_forward.1} parent=83 // pred_fallthru
          _
      $region84: #{sae_forward.1} parent=5 // pred_fallthru
        _
    $region6: #{sae_forward.1} parent=1 // loop_footer
      %s27 = sadd.s32 1, %s23
    $region7: #{sae_forward.1} parent=1 // loop_footer_branch
      %22 = sbr.rel target = $region3
    $region8: #{sae_forward.1} parent=1 // loop_exit
      _
    %1145 = vsyncpa [#allocation3], 1
    %s1146 = scalar_lea.sflag [#allocation3], 1
    %1147 = vsyncpa %s1146, 1
    %1148 = vsyncpa [#allocation6], 1
    %1149 = vsyncpa [#allocation9], 1
    %1150 = vsyncpa [#allocation4], 1
    %s1151 = scalar_lea.sflag [#allocation4], 1
    %1152 = vsyncpa %s1151, 1

</llo_original>
